<compile_context>
chip_gen: v6e
topology: v6e:2x2x1
jax: 0.10.0
libtpu: 0.0.40
codegen_flags: <defaults>
</compile_context>

<pallas_src>
import functools

import jax
import jax.numpy as jnp
from jax.experimental import pallas as pl
from jax.experimental.pallas import tpu as pltpu

TN = 128        # nodes per node block (sublane axis of the compare plane)
TE_MAX = 4096   # edges per edge tile (lane axis); (TN, TE) f32 plane = 2 MiB
LANE = 128      # lane width / edge padding granule


def _round_up(x, m):
    return ((x + m - 1) // m) * m


def _flow_loss_kernel(nn_ref, src_ref, dst_ref, y_ref, out_ref, acc_ref, *, tn):
    i = pl.program_id(0)   # node block (parallel)
    j = pl.program_id(1)   # edge block (reduction, innermost)

    @pl.when(j == 0)
    def _init():
        acc_ref[...] = jnp.zeros_like(acc_ref)

    # Node ids handled by this block, on the sublane axis: (TN, 1).
    node_ids = i * tn + jax.lax.broadcasted_iota(jnp.int32, (tn, 1), 0)

    src = src_ref[...]   # (1, TE) int32, padded with -1 (never matches a node)
    dst = dst_ref[...]   # (1, TE) int32, padded with -1
    y = y_ref[...]       # (1, TE) float32, padded with 0

    # Fused signed scatter-add:  in - out = sum_e y_e * ([dst==n] - [src==n]).
    signed = (jnp.where(dst == node_ids, y, 0.0)
              - jnp.where(src == node_ids, y, 0.0))            # (TN, TE)
    acc_ref[...] += jnp.sum(signed, axis=1, keepdims=True)     # (TN, 1)

    @pl.when(j == pl.num_programs(1) - 1)
    def _finalize():
        num_nodes = nn_ref[0]
        valid = node_ids < num_nodes                      # mask node padding
        diff = jnp.where(valid, jnp.abs(acc_ref[...]), 0.0)    # (TN, 1)
        out_ref[...] = diff[None]                               # (1, TN, 1)


def flow_loss(edge_index, y_hat, reduction='mean', num_nodes=None,
              max_num_nodes=None):
    """edge_index: int (2, E); y_hat: float (E,) or (E, 1).

    num_nodes:     optional; if None it is computed on host (torch .item()
                   semantics -> device sync, not jit-able).
    max_num_nodes: optional static upper bound on num_nodes; if given, the
                   node grid is sized from it so `num_nodes` may be a traced
                   scalar and the whole function can be jax.jit-ed.
    """
    assert edge_index.shape[0] == 2, 'Edge index is not oriented properly'
    if reduction not in ('mean', 'sum'):
        raise NotImplementedError(f'Not implemented reduction method {reduction}')

    if num_nodes is None:
        # Matches torch `edge_index.max().item() + 1` (host sync).
        num_nodes = int(jax.device_get(jnp.max(edge_index))) + 1

    # Static node-grid extent (must be a Python int).
    grid_nodes = int(max_num_nodes) if max_num_nodes is not None else int(num_nodes)

    E = edge_index.shape[1]
    y = jnp.reshape(y_hat, (-1,)).astype(jnp.float32)   # squeeze(-1) + cast

    # Edge padding / tiling.
    E_pad = _round_up(E, LANE)
    TE = min(TE_MAX, E_pad)
    E_pad = _round_up(E_pad, TE)
    pad = E_pad - E

    src = jnp.pad(edge_index[0].astype(jnp.int32), (0, pad),
                  constant_values=-1).reshape(1, E_pad)
    dst = jnp.pad(edge_index[1].astype(jnp.int32), (0, pad),
                  constant_values=-1).reshape(1, E_pad)
    yp = jnp.pad(y, (0, pad)).reshape(1, E_pad)

    nb = pl.cdiv(grid_nodes, TN)
    eb = E_pad // TE

    nn_arr = jnp.reshape(jnp.asarray(num_nodes, dtype=jnp.int32), (1,))

    kernel = functools.partial(_flow_loss_kernel, tn=TN)

    per_node = pl.pallas_call(
        kernel,
        out_shape=jax.ShapeDtypeStruct((nb, TN, 1), jnp.float32),
        grid_spec=pltpu.PrefetchScalarGridSpec(
            num_scalar_prefetch=1,
            grid=(nb, eb),
            in_specs=[
                pl.BlockSpec((1, TE), lambda i, j, nn: (0, j)),   # src
                pl.BlockSpec((1, TE), lambda i, j, nn: (0, j)),   # dst
                pl.BlockSpec((1, TE), lambda i, j, nn: (0, j)),   # y
            ],
            out_specs=pl.BlockSpec((1, TN, 1), lambda i, j, nn: (i, 0, 0)),
            scratch_shapes=[pltpu.VMEM((TN, 1), jnp.float32)],
        ),
        compiler_params=pltpu.CompilerParams(
            dimension_semantics=("parallel", "arbitrary")),
    )(nn_arr, src, dst, yp)

    total = jnp.sum(per_node)   # invalid/padded nodes are zeroed in-kernel
    if reduction == 'mean':
        return total / jnp.asarray(num_nodes, dtype=jnp.float32)
    return total


def _flow_loss_ref(edge_index, y_hat, reduction='mean'):
    """Pure-JAX reference matching the PyTorch module."""
    num_nodes = int(jnp.max(edge_index)) + 1
    y = jnp.reshape(y_hat, (-1,)).astype(jnp.float32)
    incoming = jax.ops.segment_sum(y, edge_index[1], num_segments=num_nodes)
    outgoing = jax.ops.segment_sum(y, edge_index[0], num_segments=num_nodes)
    diff = jnp.abs(incoming - outgoing)
    return diff.mean() if reduction == 'mean' else diff.sum()


if __name__ == "__main__":
    key = jax.random.PRNGKey(0)
    k1, k2, k3, k4 = jax.random.split(key, 4)

    # --- Small graph: single node block, single edge tile ---
    E1, N1 = 24, 12
    ei1 = jax.random.randint(k1, (2, E1), 0, N1, dtype=jnp.int32)
    y1 = jax.random.normal(k2, (E1, 1), dtype=jnp.float32)

    loss_mean = jax.block_until_ready(flow_loss(ei1, y1, 'mean'))
    loss_sum = jax.block_until_ready(flow_loss(ei1, y1, 'sum'))
    ref_mean = _flow_loss_ref(ei1, y1, 'mean')
    ref_sum = _flow_loss_ref(ei1, y1, 'sum')
    assert jnp.allclose(loss_mean, ref_mean, rtol=1e-5, atol=1e-5), (loss_mean, ref_mean)
    assert jnp.allclose(loss_sum, ref_sum, rtol=1e-5, atol=1e-5), (loss_sum, ref_sum)

    # --- Larger graph: multiple node blocks and multiple edge tiles ---
    E2, N2 = 5000, 300
    ei2 = jax.random.randint(k3, (2, E2), 0, N2, dtype=jnp.int32)
    ei2 = ei2.at[0, 0].set(N2 - 1)   # make num_nodes deterministic = N2
    y2 = jax.random.normal(k4, (E2, 1), dtype=jnp.float32)

    loss2 = jax.block_until_ready(flow_loss(ei2, y2, 'mean'))
    ref2 = _flow_loss_ref(ei2, y2, 'mean')
    assert jnp.allclose(loss2, ref2, rtol=1e-5, atol=1e-4), (loss2, ref2)

    # --- jit-compatible path: static node-grid bound + traced num_nodes ---
    nn2 = int(jnp.max(ei2)) + 1
    flow_jit = jax.jit(flow_loss, static_argnames=('reduction', 'max_num_nodes'))
    loss2_jit = jax.block_until_ready(
        flow_jit(ei2, y2, reduction='mean',
                 num_nodes=jnp.asarray(nn2, jnp.int32), max_num_nodes=384))
    assert jnp.allclose(loss2_jit, ref2, rtol=1e-5, atol=1e-4), (loss2_jit, ref2)

    print("KERNEL_OK")
</pallas_src>

<mosaic_0001>
module attributes {stable_mosaic.version = 11 : i64} {
  func.func @_flow_loss_kernel(%arg0: i32, %arg1: i32, %arg2: memref<1xi32, #tpu.memory_space<smem>>, %arg3: memref<1x128xi32, #tpu.memory_space<vmem>>, %arg4: memref<1x128xi32, #tpu.memory_space<vmem>>, %arg5: memref<1x128xf32, #tpu.memory_space<vmem>>, %arg6: memref<1x128x1xf32, #tpu.memory_space<vmem>>, %arg7: memref<128x1xf32, #tpu.memory_space<vmem>>) attributes {dimension_semantics = [#tpu.dimension_semantics<parallel>, #tpu.dimension_semantics<arbitrary>], iteration_bounds = array<i64: 1, 1>, scalar_prefetch = 1 : i64, scratch_operands = 1 : i64, tpu.core_type = #tpu.core_type<tc>, window_params = [{transform_indices = @transform_0, window_bounds = array<i64: 1, 128>}, {transform_indices = @transform_1, window_bounds = array<i64: 1, 128>}, {transform_indices = @transform_2, window_bounds = array<i64: 1, 128>}, {transform_indices = @transform_3, window_bounds = array<i64: 1, 128, 1>}]} {
    %c0_i32 = arith.constant 0 : i32
    %0 = arith.cmpi eq, %arg1, %c0_i32 : i32
    %1 = arith.extui %0 : i1 to i32
    %c0_i32_0 = arith.constant 0 : i32
    %2 = arith.cmpi ne, %1, %c0_i32_0 : i32
    scf.if %2 {
      %cst_14 = arith.constant 0.000000e+00 : f32
      %33 = vector.broadcast %cst_14 : f32 to vector<128x1xf32>
      %c0_15 = arith.constant 0 : index
      %c0_16 = arith.constant 0 : index
      %34 = vector.load %arg7[%c0_15, %c0_16] : memref<128x1xf32, #tpu.memory_space<vmem>>, vector<128x1xf32>
      tpu.vector_store %arg7[%c0_15, %c0_16], %33 {strides = array<i32>} : memref<128x1xf32, #tpu.memory_space<vmem>>, vector<128x1xf32>,
    } else {
    }
    %c128_i32 = arith.constant 128 : i32
    %3 = arith.muli %arg0, %c128_i32 : i32
    %4 = tpu.iota {dimensions = array<i32: 0>} : vector<128x1xi32>
    %5 = vector.broadcast %3 : i32 to vector<128x1xi32>
    %6 = arith.addi %5, %4 : vector<128x1xi32>
    %c0 = arith.constant 0 : index
    %c0_1 = arith.constant 0 : index
    %7 = vector.load %arg3[%c0, %c0_1] : memref<1x128xi32, #tpu.memory_space<vmem>>, vector<1x128xi32>
    %c0_2 = arith.constant 0 : index
    %c0_3 = arith.constant 0 : index
    %8 = vector.load %arg4[%c0_2, %c0_3] : memref<1x128xi32, #tpu.memory_space<vmem>>, vector<1x128xi32>
    %c0_4 = arith.constant 0 : index
    %c0_5 = arith.constant 0 : index
    %9 = vector.load %arg5[%c0_4, %c0_5] : memref<1x128xf32, #tpu.memory_space<vmem>>, vector<1x128xf32>
    %10 = vector.broadcast %8 : vector<1x128xi32> to vector<128x128xi32>
    %11 = vector.broadcast %6 : vector<128x1xi32> to vector<128x128xi32>
    %12 = arith.cmpi eq, %10, %11 : vector<128x128xi32>
    %cst = arith.constant 0.000000e+00 : f32
    %13 = vector.shape_cast %9 : vector<1x128xf32> to vector<1x128xf32>
    %14 = vector.broadcast %13 : vector<1x128xf32> to vector<128x128xf32>
    %15 = vector.broadcast %cst : f32 to vector<128x128xf32>
    %16 = arith.select %12, %14, %15 : vector<128x128xi1>, vector<128x128xf32>
    %17 = vector.broadcast %7 : vector<1x128xi32> to vector<128x128xi32>
    %18 = vector.broadcast %6 : vector<128x1xi32> to vector<128x128xi32>
    %19 = arith.cmpi eq, %17, %18 : vector<128x128xi32>
    %cst_6 = arith.constant 0.000000e+00 : f32
    %20 = vector.shape_cast %9 : vector<1x128xf32> to vector<1x128xf32>
    %21 = vector.broadcast %20 : vector<1x128xf32> to vector<128x128xf32>
    %22 = vector.broadcast %cst_6 : f32 to vector<128x128xf32>
    %23 = arith.select %19, %21, %22 : vector<128x128xi1>, vector<128x128xf32>
    %24 = arith.subf %16, %23 : vector<128x128xf32>
    %c0_7 = arith.constant 0 : index
    %c0_8 = arith.constant 0 : index
    %25 = vector.load %arg7[%c0_7, %c0_8] : memref<128x1xf32, #tpu.memory_space<vmem>>, vector<128x1xf32>
    %cst_9 = arith.constant dense<0.000000e+00> : vector<128xf32>
    %26 = vector.multi_reduction <add>, %24, %cst_9 [1] : vector<128x128xf32> to vector<128xf32>
    %27 = vector.shape_cast %26 : vector<128xf32> to vector<128x1xf32>
    %28 = arith.addf %25, %27 : vector<128x1xf32>
    %c0_10 = arith.constant 0 : index
    %c0_11 = arith.constant 0 : index
    %29 = vector.load %arg7[%c0_10, %c0_11] : memref<128x1xf32, #tpu.memory_space<vmem>>, vector<128x1xf32>
    tpu.vector_store %arg7[%c0_10, %c0_11], %28 {strides = array<i32>} : memref<128x1xf32, #tpu.memory_space<vmem>>, vector<128x1xf32>,
    %c0_i32_12 = arith.constant 0 : i32
    %30 = arith.cmpi eq, %arg1, %c0_i32_12 : i32
    %31 = arith.extui %30 : i1 to i32
    %c0_i32_13 = arith.constant 0 : i32
    %32 = arith.cmpi ne, %31, %c0_i32_13 : i32
    scf.if %32 {
      %c0_14 = arith.constant 0 : index
      %33 = memref.load %arg2[%c0_14] : memref<1xi32, #tpu.memory_space<smem>>
      %34 = vector.broadcast %33 : i32 to vector<128x1xi32>
      %35 = arith.cmpi slt, %6, %34 : vector<128x1xi32>
      %c0_15 = arith.constant 0 : index
      %c0_16 = arith.constant 0 : index
      %36 = vector.load %arg7[%c0_15, %c0_16] : memref<128x1xf32, #tpu.memory_space<vmem>>, vector<128x1xf32>
      %37 = math.absf %36 : vector<128x1xf32>
      %cst_17 = arith.constant 0.000000e+00 : f32
      %38 = vector.broadcast %cst_17 : f32 to vector<128x1xf32>
      %39 = arith.select %35, %37, %38 : vector<128x1xi1>, vector<128x1xf32>
      %40 = vector.shape_cast %39 : vector<128x1xf32> to vector<1x128x1xf32>
      %c0_18 = arith.constant 0 : index
      %c0_19 = arith.constant 0 : index
      %c0_20 = arith.constant 0 : index
      %41 = vector.load %arg6[%c0_18, %c0_19, %c0_20] : memref<1x128x1xf32, #tpu.memory_space<vmem>>, vector<1x128x1xf32>
      tpu.vector_store %arg6[%c0_18, %c0_19, %c0_20], %40 {strides = array<i32>} : memref<1x128x1xf32, #tpu.memory_space<vmem>>, vector<1x128x1xf32>,
    } else {
    }
    return
  }
  func.func @transform_0(%arg0: i32, %arg1: i32, %arg2: memref<1xi32, #tpu.memory_space<smem>>) -> (i32, i32) {
    %c0_i32 = arith.constant 0 : i32
    %c0_i32_0 = arith.constant 0 : i32
    return %c0_i32, %arg1 : i32, i32
  }
  func.func @transform_1(%arg0: i32, %arg1: i32, %arg2: memref<1xi32, #tpu.memory_space<smem>>) -> (i32, i32) {
    %c0_i32 = arith.constant 0 : i32
    %c0_i32_0 = arith.constant 0 : i32
    return %c0_i32, %arg1 : i32, i32
  }
  func.func @transform_2(%arg0: i32, %arg1: i32, %arg2: memref<1xi32, #tpu.memory_space<smem>>) -> (i32, i32) {
    %c0_i32 = arith.constant 0 : i32
    %c0_i32_0 = arith.constant 0 : i32
    return %c0_i32, %arg1 : i32, i32
  }
  func.func @transform_3(%arg0: i32, %arg1: i32, %arg2: memref<1xi32, #tpu.memory_space<smem>>) -> (i32, i32, i32) {
    %c0_i32 = arith.constant 0 : i32
    %c0_i32_0 = arith.constant 0 : i32
    %c0_i32_1 = arith.constant 0 : i32
    return %arg0, %c0_i32, %c0_i32_0 : i32, i32, i32
  }
}

</mosaic_0001>

<llo_original>
// kernel: tpu_custom_call.1
$region0: #{tpu_custom_call.1}
  #allocation0 [shape = 'u32[]', space=smem, size = 0x4, offset = 0x4, fixed_abs, tag = 'smem constant byte address 0x4 - core index']
  #allocation1 [shape = 'u32[144,128]{1,0:T(1,128)}', space=vmem, size = 0x12000, scoped, tag = 'internal scratch']
  #allocation2 [shape = 'f32[128,1]{1,0:T(8,128)}', space=vmem, size = 0x10000, scoped, tag = 'scratch operand']
  #allocation3 [shape = 's32[1]{0}', space=sflag, size = 0x4, scoped, tag = 'scoped memory for tpu_custom_call.1']
  #allocation4 [shape = 's32[1]{0:T(128)S(6)}', space=smem, size = 0x200, scoped, tag = 'prefetched SMEM operand 0']
  %s0 = inlined_call_operand.<no memory space> [shape: s32[1], index: 0, kind: input, shape index: {}]
  %s1 = inlined_call_operand.vmem [shape: s32[1,128], index: 1, kind: input, shape index: {}]
  %s2 = inlined_call_operand.vmem [shape: s32[1,128], index: 2, kind: input, shape index: {}]
  %s3 = inlined_call_operand.vmem [shape: f32[1,128], index: 3, kind: input, shape index: {}]
  %s4 = inlined_call_operand.vmem [shape: f32[1,128,1], index: 4, kind: output, shape index: {}]
  %s5 = sld [smem:[#allocation0]]
  $region30: #{tpu_custom_call.1} parent=0
    _
  %s7 = ssub.s32 1, %s5
  %s8 = scalar_select 0, %s7, %s5
  %9 = sst [smem:[#allocation4]] %s0
  // Predicated region
  $region2: #{tpu_custom_call.1} parent=0 // pred_check
    _
  $region3: #{tpu_custom_call.1} parent=0 // pred_check_branch
    %11 = sbr.rel (0) target = $region5
  $region4: #{tpu_custom_call.1} parent=0 // pred_region
    _
  $region5: #{tpu_custom_call.1} parent=0 // pred_fallthru
    _
  // Predicated region
  $region6: #{tpu_custom_call.1} parent=0 // pred_check
    _
  $region7: #{tpu_custom_call.1} parent=0 // pred_check_branch
    %13 = sbr.rel (0) target = $region9
  $region8: #{tpu_custom_call.1} parent=0 // pred_region
    _
  $region9: #{tpu_custom_call.1} parent=0 // pred_fallthru
    _
  // Predicated region
  $region10: #{tpu_custom_call.1} parent=0 // pred_check
    _
  $region11: #{tpu_custom_call.1} parent=0 // pred_check_branch
    %15 = sbr.rel (0) target = $region13
  $region12: #{tpu_custom_call.1} parent=0 // pred_region
    _
  $region13: #{tpu_custom_call.1} parent=0 // pred_fallthru
    _
  %p16 = scmp.eq.s32.totalorder 0, 0
  // Predicated region
  $region14: #{tpu_custom_call.1} parent=0 // pred_check
    %p17 = pneg %p16
  $region15: #{tpu_custom_call.1} parent=0 // pred_check_branch
    %19 = sbr.rel (%p17) target = $region17
  $region16: #{tpu_custom_call.1} parent=0 // pred_region
    %vm20 = vcmask 7168
    %21 = vst.msk [vmem:[#allocation2] sm:$0xff] %vm20, 0.0
    %22 = vst.msk [vmem:[#allocation2 + $0x8] sm:$0xff] %vm20, 0.0
    %23 = vst.msk [vmem:[#allocation2 + $0x10] sm:$0xff] %vm20, 0.0
    %24 = vst.msk [vmem:[#allocation2 + $0x18] sm:$0xff] %vm20, 0.0
    %25 = vst.msk [vmem:[#allocation2 + $0x20] sm:$0xff] %vm20, 0.0
    %26 = vst.msk [vmem:[#allocation2 + $0x28] sm:$0xff] %vm20, 0.0
    %27 = vst.msk [vmem:[#allocation2 + $0x30] sm:$0xff] %vm20, 0.0
    %28 = vst.msk [vmem:[#allocation2 + $0x38] sm:$0xff] %vm20, 0.0
    %29 = vst.msk [vmem:[#allocation2 + $0x40] sm:$0xff] %vm20, 0.0
    %30 = vst.msk [vmem:[#allocation2 + $0x48] sm:$0xff] %vm20, 0.0
    %31 = vst.msk [vmem:[#allocation2 + $0x50] sm:$0xff] %vm20, 0.0
    %32 = vst.msk [vmem:[#allocation2 + $0x58] sm:$0xff] %vm20, 0.0
    %33 = vst.msk [vmem:[#allocation2 + $0x60] sm:$0xff] %vm20, 0.0
    %34 = vst.msk [vmem:[#allocation2 + $0x68] sm:$0xff] %vm20, 0.0
    %35 = vst.msk [vmem:[#allocation2 + $0x70] sm:$0xff] %vm20, 0.0
    %36 = vst.msk [vmem:[#allocation2 + $0x78] sm:$0xff] %vm20, 0.0
  $region17: #{tpu_custom_call.1} parent=0 // pred_fallthru
    _
  %s37 = smul.u32 0, 128
  %v38 = vlaneseq
  %v39 = vshrl.u32 %v38, 7
  %v40 = vadd.s32 %v39, 8
  %v41 = vadd.s32 %v39, 16
  %v42 = vadd.s32 %v39, 24
  %v43 = vadd.s32 %v39, 32
  %v44 = vadd.s32 %v39, 40
  %v45 = vadd.s32 %v39, 48
  %v46 = vadd.s32 %v39, 56
  %v47 = vadd.s32 %v39, 64
  %v48 = vadd.s32 %v39, 72
  %v49 = vadd.s32 %v39, 80
  %v50 = vadd.s32 %v39, 88
  %v51 = vadd.s32 %v39, 96
  %v52 = vadd.s32 %v39, 104
  %v53 = vadd.s32 %v39, 112
  %v54 = vadd.s32 %v39, 120
  %v55 = vstv %s37
  %v56 = vadd.s32 %v55, %v39
  %v57 = vadd.s32 %v55, %v40
  %v58 = vadd.s32 %v55, %v41
  %v59 = vadd.s32 %v55, %v42
  %v60 = vadd.s32 %v55, %v43
  %v61 = vadd.s32 %v55, %v44
  %v62 = vadd.s32 %v55, %v45
  %v63 = vadd.s32 %v55, %v46
  %v64 = vadd.s32 %v55, %v47
  %v65 = vadd.s32 %v55, %v48
  %v66 = vadd.s32 %v55, %v49
  %v67 = vadd.s32 %v55, %v50
  %v68 = vadd.s32 %v55, %v51
  %v69 = vadd.s32 %v55, %v52
  %v70 = vadd.s32 %v55, %v53
  %v71 = vadd.s32 %v55, %v54
  %v72 = vld [vmem:[%s1] sm:$0x1]
  %v73 = vld [vmem:[%s2] sm:$0x1]
  %v74 = vld [vmem:[%s3] sm:$0x1]
  %v75 = vlaneseq
  %v76 = vshrl.u32 %v75, 7
  %v77 = vsub.s32 0, %v76
  %v78 = vrot.slane %v73, %v77
  %vm79 = vcmp.eq.s32.totalorder %v78, %v56
  %vm80 = vcmp.eq.s32.totalorder %v78, %v57
  %vm81 = vcmp.eq.s32.totalorder %v78, %v58
  %vm82 = vcmp.eq.s32.totalorder %v78, %v59
  %vm83 = vcmp.eq.s32.totalorder %v78, %v60
  %vm84 = vcmp.eq.s32.totalorder %v78, %v61
  %vm85 = vcmp.eq.s32.totalorder %v78, %v62
  %vm86 = vcmp.eq.s32.totalorder %v78, %v63
  %vm87 = vcmp.eq.s32.totalorder %v78, %v64
  %vm88 = vcmp.eq.s32.totalorder %v78, %v65
  %vm89 = vcmp.eq.s32.totalorder %v78, %v66
  %vm90 = vcmp.eq.s32.totalorder %v78, %v67
  %vm91 = vcmp.eq.s32.totalorder %v78, %v68
  %vm92 = vcmp.eq.s32.totalorder %v78, %v69
  %vm93 = vcmp.eq.s32.totalorder %v78, %v70
  %vm94 = vcmp.eq.s32.totalorder %v78, %v71
  %v96 = vlaneseq
  %v97 = vshrl.u32 %v96, 7
  %v98 = vsub.s32 0, %v97
  %v99 = vrot.slane %v74, %v98
  %v101 = vsel %vm79, %v99, 0.0
  %v102 = vsel %vm80, %v99, 0.0
  %v103 = vsel %vm81, %v99, 0.0
  %v104 = vsel %vm82, %v99, 0.0
  %v105 = vsel %vm83, %v99, 0.0
  %v106 = vsel %vm84, %v99, 0.0
  %v107 = vsel %vm85, %v99, 0.0
  %v108 = vsel %vm86, %v99, 0.0
  %v109 = vsel %vm87, %v99, 0.0
  %v110 = vsel %vm88, %v99, 0.0
  %v111 = vsel %vm89, %v99, 0.0
  %v112 = vsel %vm90, %v99, 0.0
  %v113 = vsel %vm91, %v99, 0.0
  %v114 = vsel %vm92, %v99, 0.0
  %v115 = vsel %vm93, %v99, 0.0
  %v116 = vsel %vm94, %v99, 0.0
  %v117 = vlaneseq
  %v118 = vshrl.u32 %v117, 7
  %v119 = vsub.s32 0, %v118
  %v120 = vrot.slane %v72, %v119
  %vm121 = vcmp.eq.s32.totalorder %v120, %v56
  %vm122 = vcmp.eq.s32.totalorder %v120, %v57
  %vm123 = vcmp.eq.s32.totalorder %v120, %v58
  %vm124 = vcmp.eq.s32.totalorder %v120, %v59
  %vm125 = vcmp.eq.s32.totalorder %v120, %v60
  %vm126 = vcmp.eq.s32.totalorder %v120, %v61
  %vm127 = vcmp.eq.s32.totalorder %v120, %v62
  %vm128 = vcmp.eq.s32.totalorder %v120, %v63
  %vm129 = vcmp.eq.s32.totalorder %v120, %v64
  %vm130 = vcmp.eq.s32.totalorder %v120, %v65
  %vm131 = vcmp.eq.s32.totalorder %v120, %v66
  %vm132 = vcmp.eq.s32.totalorder %v120, %v67
  %vm133 = vcmp.eq.s32.totalorder %v120, %v68
  %vm134 = vcmp.eq.s32.totalorder %v120, %v69
  %vm135 = vcmp.eq.s32.totalorder %v120, %v70
  %vm136 = vcmp.eq.s32.totalorder %v120, %v71
  %v137 = vsel %vm121, %v99, 0.0
  %v138 = vsel %vm122, %v99, 0.0
  %v139 = vsel %vm123, %v99, 0.0
  %v140 = vsel %vm124, %v99, 0.0
  %v141 = vsel %vm125, %v99, 0.0
  %v142 = vsel %vm126, %v99, 0.0
  %v143 = vsel %vm127, %v99, 0.0
  %v144 = vsel %vm128, %v99, 0.0
  %v145 = vsel %vm129, %v99, 0.0
  %v146 = vsel %vm130, %v99, 0.0
  %v147 = vsel %vm131, %v99, 0.0
  %v148 = vsel %vm132, %v99, 0.0
  %v149 = vsel %vm133, %v99, 0.0
  %v150 = vsel %vm134, %v99, 0.0
  %v151 = vsel %vm135, %v99, 0.0
  %v152 = vsel %vm136, %v99, 0.0
  %v153 = vsub.f32 %v101, %v137
  %v154 = vsub.f32 %v102, %v138
  %v155 = vsub.f32 %v103, %v139
  %v156 = vsub.f32 %v104, %v140
  %v157 = vsub.f32 %v105, %v141
  %v158 = vsub.f32 %v106, %v142
  %v159 = vsub.f32 %v107, %v143
  %v160 = vsub.f32 %v108, %v144
  %v161 = vsub.f32 %v109, %v145
  %v162 = vsub.f32 %v110, %v146
  %v163 = vsub.f32 %v111, %v147
  %v164 = vsub.f32 %v112, %v148
  %v165 = vsub.f32 %v113, %v149
  %v166 = vsub.f32 %v114, %v150
  %v167 = vsub.f32 %v115, %v151
  %v168 = vsub.f32 %v116, %v152
  %v169 = vld [vmem:[#allocation2] sm:$0xff]
  %v170 = vld [vmem:[#allocation2 + $0x8] sm:$0xff]
  %v171 = vld [vmem:[#allocation2 + $0x10] sm:$0xff]
  %v172 = vld [vmem:[#allocation2 + $0x18] sm:$0xff]
  %v173 = vld [vmem:[#allocation2 + $0x20] sm:$0xff]
  %v174 = vld [vmem:[#allocation2 + $0x28] sm:$0xff]
  %v175 = vld [vmem:[#allocation2 + $0x30] sm:$0xff]
  %v176 = vld [vmem:[#allocation2 + $0x38] sm:$0xff]
  %v177 = vld [vmem:[#allocation2 + $0x40] sm:$0xff]
  %v178 = vld [vmem:[#allocation2 + $0x48] sm:$0xff]
  %v179 = vld [vmem:[#allocation2 + $0x50] sm:$0xff]
  %v180 = vld [vmem:[#allocation2 + $0x58] sm:$0xff]
  %v181 = vld [vmem:[#allocation2 + $0x60] sm:$0xff]
  %v182 = vld [vmem:[#allocation2 + $0x68] sm:$0xff]
  %v183 = vld [vmem:[#allocation2 + $0x70] sm:$0xff]
  %v184 = vld [vmem:[#allocation2 + $0x78] sm:$0xff]
  %185 = vadd.xlane.f32.xlu0 %v153
  %v186 = vpop.xlane.xlu0 %185
  %187 = vadd.xlane.f32.xlu0 %v154
  %v188 = vpop.xlane.xlu0 %187
  %189 = vadd.xlane.f32.xlu0 %v155
  %v190 = vpop.xlane.xlu0 %189
  %191 = vadd.xlane.f32.xlu0 %v156
  %v192 = vpop.xlane.xlu0 %191
  %193 = vadd.xlane.f32.xlu0 %v157
  %v194 = vpop.xlane.xlu0 %193
  %195 = vadd.xlane.f32.xlu0 %v158
  %v196 = vpop.xlane.xlu0 %195
  %197 = vadd.xlane.f32.xlu0 %v159
  %v198 = vpop.xlane.xlu0 %197
  %199 = vadd.xlane.f32.xlu0 %v160
  %v200 = vpop.xlane.xlu0 %199
  %201 = vadd.xlane.f32.xlu0 %v161
  %v202 = vpop.xlane.xlu0 %201
  %203 = vadd.xlane.f32.xlu0 %v162
  %v204 = vpop.xlane.xlu0 %203
  %205 = vadd.xlane.f32.xlu0 %v163
  %v206 = vpop.xlane.xlu0 %205
  %207 = vadd.xlane.f32.xlu0 %v164
  %v208 = vpop.xlane.xlu0 %207
  %209 = vadd.xlane.f32.xlu0 %v165
  %v210 = vpop.xlane.xlu0 %209
  %211 = vadd.xlane.f32.xlu0 %v166
  %v212 = vpop.xlane.xlu0 %211
  %213 = vadd.xlane.f32.xlu0 %v167
  %v214 = vpop.xlane.xlu0 %213
  %215 = vadd.xlane.f32.xlu0 %v168
  %v216 = vpop.xlane.xlu0 %215
  %v217 = vadd.f32 %v169, %v186
  %v218 = vadd.f32 %v170, %v188
  %v219 = vadd.f32 %v171, %v190
  %v220 = vadd.f32 %v172, %v192
  %v221 = vadd.f32 %v173, %v194
  %v222 = vadd.f32 %v174, %v196
  %v223 = vadd.f32 %v175, %v198
  %v224 = vadd.f32 %v176, %v200
  %v225 = vadd.f32 %v177, %v202
  %v226 = vadd.f32 %v178, %v204
  %v227 = vadd.f32 %v179, %v206
  %v228 = vadd.f32 %v180, %v208
  %v229 = vadd.f32 %v181, %v210
  %v230 = vadd.f32 %v182, %v212
  %v231 = vadd.f32 %v183, %v214
  %v232 = vadd.f32 %v184, %v216
  %vm233 = vcmask 7168
  %234 = vst.msk [vmem:[#allocation2] sm:$0xff] %vm233, %v217
  %235 = vst.msk [vmem:[#allocation2 + $0x8] sm:$0xff] %vm233, %v218
  %236 = vst.msk [vmem:[#allocation2 + $0x10] sm:$0xff] %vm233, %v219
  %237 = vst.msk [vmem:[#allocation2 + $0x18] sm:$0xff] %vm233, %v220
  %238 = vst.msk [vmem:[#allocation2 + $0x20] sm:$0xff] %vm233, %v221
  %239 = vst.msk [vmem:[#allocation2 + $0x28] sm:$0xff] %vm233, %v222
  %240 = vst.msk [vmem:[#allocation2 + $0x30] sm:$0xff] %vm233, %v223
  %241 = vst.msk [vmem:[#allocation2 + $0x38] sm:$0xff] %vm233, %v224
  %242 = vst.msk [vmem:[#allocation2 + $0x40] sm:$0xff] %vm233, %v225
  %243 = vst.msk [vmem:[#allocation2 + $0x48] sm:$0xff] %vm233, %v226
  %244 = vst.msk [vmem:[#allocation2 + $0x50] sm:$0xff] %vm233, %v227
  %245 = vst.msk [vmem:[#allocation2 + $0x58] sm:$0xff] %vm233, %v228
  %246 = vst.msk [vmem:[#allocation2 + $0x60] sm:$0xff] %vm233, %v229
  %247 = vst.msk [vmem:[#allocation2 + $0x68] sm:$0xff] %vm233, %v230
  %248 = vst.msk [vmem:[#allocation2 + $0x70] sm:$0xff] %vm233, %v231
  %249 = vst.msk [vmem:[#allocation2 + $0x78] sm:$0xff] %vm233, %v232
  // Predicated region
  $region18: #{tpu_custom_call.1} parent=0 // pred_check
    %p250 = pneg %p16
  $region19: #{tpu_custom_call.1} parent=0 // pred_check_branch
    %252 = sbr.rel (%p250) target = $region21
  $region20: #{tpu_custom_call.1} parent=0 // pred_region
    %s253 = sld [smem:[#allocation4]]
    %v254 = vstv %s253
    %vm255 = vcmp.lt.s32.totalorder %v56, %v254
    %vm256 = vcmp.lt.s32.totalorder %v57, %v254
    %vm257 = vcmp.lt.s32.totalorder %v58, %v254
    %vm258 = vcmp.lt.s32.totalorder %v59, %v254
    %vm259 = vcmp.lt.s32.totalorder %v60, %v254
    %vm260 = vcmp.lt.s32.totalorder %v61, %v254
    %vm261 = vcmp.lt.s32.totalorder %v62, %v254
    %vm262 = vcmp.lt.s32.totalorder %v63, %v254
    %vm263 = vcmp.lt.s32.totalorder %v64, %v254
    %vm264 = vcmp.lt.s32.totalorder %v65, %v254
    %vm265 = vcmp.lt.s32.totalorder %v66, %v254
    %vm266 = vcmp.lt.s32.totalorder %v67, %v254
    %vm267 = vcmp.lt.s32.totalorder %v68, %v254
    %vm268 = vcmp.lt.s32.totalorder %v69, %v254
    %vm269 = vcmp.lt.s32.totalorder %v70, %v254
    %vm270 = vcmp.lt.s32.totalorder %v71, %v254
    %v271 = vld [vmem:[#allocation2] sm:$0xff]
    %v272 = vld [vmem:[#allocation2 + $0x8] sm:$0xff]
    %v273 = vld [vmem:[#allocation2 + $0x10] sm:$0xff]
    %v274 = vld [vmem:[#allocation2 + $0x18] sm:$0xff]
    %v275 = vld [vmem:[#allocation2 + $0x20] sm:$0xff]
    %v276 = vld [vmem:[#allocation2 + $0x28] sm:$0xff]
    %v277 = vld [vmem:[#allocation2 + $0x30] sm:$0xff]
    %v278 = vld [vmem:[#allocation2 + $0x38] sm:$0xff]
    %v279 = vld [vmem:[#allocation2 + $0x40] sm:$0xff]
    %v280 = vld [vmem:[#allocation2 + $0x48] sm:$0xff]
    %v281 = vld [vmem:[#allocation2 + $0x50] sm:$0xff]
    %v282 = vld [vmem:[#allocation2 + $0x58] sm:$0xff]
    %v283 = vld [vmem:[#allocation2 + $0x60] sm:$0xff]
    %v284 = vld [vmem:[#allocation2 + $0x68] sm:$0xff]
    %v285 = vld [vmem:[#allocation2 + $0x70] sm:$0xff]
    %v286 = vld [vmem:[#allocation2 + $0x78] sm:$0xff]
    %v287 = vand.u32 2147483647, %v271
    %v288 = vand.u32 2147483647, %v272
    %v289 = vand.u32 2147483647, %v273
    %v290 = vand.u32 2147483647, %v274
    %v291 = vand.u32 2147483647, %v275
    %v292 = vand.u32 2147483647, %v276
    %v293 = vand.u32 2147483647, %v277
    %v294 = vand.u32 2147483647, %v278
    %v295 = vand.u32 2147483647, %v279
    %v296 = vand.u32 2147483647, %v280
    %v297 = vand.u32 2147483647, %v281
    %v298 = vand.u32 2147483647, %v282
    %v299 = vand.u32 2147483647, %v283
    %v300 = vand.u32 2147483647, %v284
    %v301 = vand.u32 2147483647, %v285
    %v302 = vand.u32 2147483647, %v286
    %v303 = vsel %vm255, %v287, 0.0
    %v304 = vsel %vm256, %v288, 0.0
    %v305 = vsel %vm257, %v289, 0.0
    %v306 = vsel %vm258, %v290, 0.0
    %v307 = vsel %vm259, %v291, 0.0
    %v308 = vsel %vm260, %v292, 0.0
    %v309 = vsel %vm261, %v293, 0.0
    %v310 = vsel %vm262, %v294, 0.0
    %v311 = vsel %vm263, %v295, 0.0
    %v312 = vsel %vm264, %v296, 0.0
    %v313 = vsel %vm265, %v297, 0.0
    %v314 = vsel %vm266, %v298, 0.0
    %v315 = vsel %vm267, %v299, 0.0
    %v316 = vsel %vm268, %v300, 0.0
    %v317 = vsel %vm269, %v301, 0.0
    %v318 = vsel %vm270, %v302, 0.0
    %319 = vst.msk [vmem:[%s4] sm:$0xff] %vm233, %v303
    %320 = vst.msk [vmem:[%s4 + $0x8] sm:$0xff] %vm233, %v304
    %321 = vst.msk [vmem:[%s4 + $0x10] sm:$0xff] %vm233, %v305
    %322 = vst.msk [vmem:[%s4 + $0x18] sm:$0xff] %vm233, %v306
    %323 = vst.msk [vmem:[%s4 + $0x20] sm:$0xff] %vm233, %v307
    %324 = vst.msk [vmem:[%s4 + $0x28] sm:$0xff] %vm233, %v308
    %325 = vst.msk [vmem:[%s4 + $0x30] sm:$0xff] %vm233, %v309
    %326 = vst.msk [vmem:[%s4 + $0x38] sm:$0xff] %vm233, %v310
    %327 = vst.msk [vmem:[%s4 + $0x40] sm:$0xff] %vm233, %v311
    %328 = vst.msk [vmem:[%s4 + $0x48] sm:$0xff] %vm233, %v312
    %329 = vst.msk [vmem:[%s4 + $0x50] sm:$0xff] %vm233, %v313
    %330 = vst.msk [vmem:[%s4 + $0x58] sm:$0xff] %vm233, %v314
    %331 = vst.msk [vmem:[%s4 + $0x60] sm:$0xff] %vm233, %v315
    %332 = vst.msk [vmem:[%s4 + $0x68] sm:$0xff] %vm233, %v316
    %333 = vst.msk [vmem:[%s4 + $0x70] sm:$0xff] %vm233, %v317
    %334 = vst.msk [vmem:[%s4 + $0x78] sm:$0xff] %vm233, %v318
  $region21: #{tpu_custom_call.1} parent=0 // pred_fallthru
    _
  // Predicated region
  $region22: #{tpu_custom_call.1} parent=0 // pred_check
    _
  $region23: #{tpu_custom_call.1} parent=0 // pred_check_branch
    %336 = sbr.rel (0) target = $region25
  $region24: #{tpu_custom_call.1} parent=0 // pred_region
    _
  $region25: #{tpu_custom_call.1} parent=0 // pred_fallthru
    _
  // Predicated region
  $region26: #{tpu_custom_call.1} parent=0 // pred_check
    _
  $region27: #{tpu_custom_call.1} parent=0 // pred_check_branch
    %338 = sbr.rel (0) target = $region29
  $region28: #{tpu_custom_call.1} parent=0 // pred_region
    _
  $region29: #{tpu_custom_call.1} parent=0 // pred_fallthru
    _

</llo_original>
